<compile_context>
chip_gen: v7x
topology: tpu7x:2x2x1
jax: 0.10.0
libtpu: 0.0.40
codegen_flags: <defaults>
</compile_context>

<pallas_src>
import jax
import jax.numpy as jnp
from jax import lax
from jax.experimental import pallas as pl
from jax.experimental.pallas import tpu as pltpu


def _round_up(n, m):
    return ((n + m - 1) // m) * m


def _cdiv(a, b):
    return (a + b - 1) // b


def _vmem_capacity_bytes():
    try:
        return int(pltpu.get_tpu_info().vmem_capacity_bytes)
    except Exception:
        return 64 * 1024 * 1024   # conservative default (v7x per-TensorCore)


def _make_kernel(compute_dtype, td, d_total, mask_last, single_k):
    """Build the kernel body.

    grid = (num_batch_tiles, num_d_tiles); axis 1 is the contraction over D.
    x_ref: (TB, TD) in x's native dtype
    w_ref: (Kpad, D_pad) resident weights (compute dtype)
    b_ref: (1, Kpad) f32 bias
    o_ref: (TB, Kpad) f32 output (doubles as the accumulator across k).
    """

    def kernel(x_ref, w_ref, b_ref, o_ref):
        x = x_ref[...]
        if mask_last:
            # Last contraction tile is ragged: zero the out-of-bounds columns
            # (garbage could be NaN/Inf; select, not arithmetic, so it's safe).
            k = pl.program_id(1)
            col = lax.broadcasted_iota(jnp.int32, x.shape, 1) + k * td
            x = jnp.where(col < d_total, x, jnp.zeros_like(x))
        if x.dtype != compute_dtype:
            x = x.astype(compute_dtype)   # in-kernel VPU cast (kernel is DMA-bound)

        dn = (((1,), (1,)), ((), ()))     # contract x dim-1 with w dim-1

        if single_k:
            acc = lax.dot_general(x, w_ref[...], dimension_numbers=dn,
                                  preferred_element_type=jnp.float32)
            o_ref[...] = (acc + b_ref[...]).astype(o_ref.dtype)
        else:
            k = pl.program_id(1)

            @pl.when(k == 0)
            def _():
                # Fold the bias into the init; o_ref is the f32 accumulator.
                o_ref[...] = jnp.broadcast_to(b_ref[...], o_ref.shape)

            off = pl.multiple_of(k * td, td)
            w = w_ref[:, pl.ds(off, td)]          # slice the resident slab
            o_ref[...] += lax.dot_general(x, w, dimension_numbers=dn,
                                          preferred_element_type=jnp.float32)

    return kernel


def clust_dist_forward(x, centroids, clust_list, curr_clust_id, *,
                       compute_dtype=jnp.bfloat16, use_pallas=None,
                       max_block_d=None):
    """Pallas equivalent of ClustDistLayer.forward.

    x:         (B, D) float
    centroids: (K, D) float
    returns    (B, K-1) float32, column order = clust_list with curr removed.

    compute_dtype controls the MXU input precision (default bf16; pass
    jnp.float32 for exact parity with the PyTorch f32 layer).
    """
    assert len(set(clust_list)) == len(clust_list), "duplicate cluster ids"
    B, D = x.shape

    curr_pos = clust_list.index(curr_clust_id)
    other_pos = [p for p, cid in enumerate(clust_list) if cid != curr_clust_id]
    assert other_pos, "need at least one cluster besides curr_clust_id"
    other_idx = jnp.asarray(other_pos, dtype=jnp.int32)
    Km1 = len(other_pos)

    # Parameter assembly is glue (plain JAX, tiny); the matmul+bias is Pallas.
    c_curr = centroids[curr_pos].astype(jnp.float32)               # (D,)
    c_other = centroids[other_idx].astype(jnp.float32)             # (Km1, D)
    w = 2.0 * (c_curr[None, :] - c_other)                          # (Km1, D)
    bias = (jnp.linalg.norm(c_curr)
            - jnp.linalg.norm(c_other, axis=1))                    # (Km1,)

    if use_pallas is None:
        # Tiny problems: one XLA dot beats the fixed pallas_call overhead.
        use_pallas = (B * D) >= (1 << 16)
    if not use_pallas:
        return (x.astype(jnp.float32) @ w.T + bias[None, :]).astype(jnp.float32)

    # ---------------- tiled Pallas path ----------------
    compute_dtype = jnp.dtype(compute_dtype)
    x_bytes = jnp.dtype(x.dtype).itemsize
    w_bytes = compute_dtype.itemsize

    # Lane-dense output: pad K-1 up to a multiple of 128 (native MXU tile).
    Kpad = _round_up(Km1, 128)

    vmem = _vmem_capacity_bytes()
    budget = int(vmem * 0.45)                     # leave compiler headroom

    def _fits_whole_d(d):
        fixed = 2 * Kpad * d * w_bytes + 2 * Kpad * 4           # weights + bias
        per_row = 2 * d * x_bytes + 2 * Kpad * 4                # x + out blocks
        return fixed + 256 * per_row <= budget                  # >=256-row tiles

    # Contraction tiling: keep the whole D resident whenever it fits the VMEM
    # budget (no D-tiling, no per-step accumulator RMW); otherwise 512-wide
    # lane tiles sliced from the resident weight slab.
    if max_block_d is not None and D > max_block_d:
        assert max_block_d % 128 == 0, "max_block_d must be a multiple of 128"
        TD = max_block_d
    elif _fits_whole_d(D):
        TD = D
    else:
        TD = 512

    if TD >= D:
        TD, D_pad, single_k, mask_last = D, D, True, False
    else:
        D_pad = _round_up(D, TD)
        single_k = False
        mask_last = (D % TD) != 0
    num_k = D_pad // TD

    # Batch tile sized against VMEM (double-buffered x & out blocks plus the
    # resident weight/bias blocks).
    fixed = 2 * Kpad * D_pad * w_bytes + 2 * Kpad * 4
    per_row = 2 * TD * x_bytes + 2 * Kpad * 4
    avail = max(budget - fixed, 8 * per_row)
    TB = max(8, min(avail // per_row, 1024))
    TB = (TB // 8) * 8
    # v7x megacore: make sure there are >=4 batch tiles for large B so both
    # TensorCores share the bandwidth; keep >=512 rows for DMA efficiency.
    if B > 1024:
        TB = min(TB, max(512, _round_up(_cdiv(B, 4), 8)))
    # Re-balance so an unlucky B doesn't leave a nearly-empty last tile.
    num_bt = _cdiv(B, TB)
    TB = max(8, min(TB, _round_up(_cdiv(B, num_bt), 8)))
    num_bt = _cdiv(B, TB)

    # Only the tiny weight/bias slabs are padded/cast wrapper-side; x is fed
    # untouched (padded cluster rows / D columns are zero, so no garbage leaks).
    w_p = jnp.zeros((Kpad, D_pad), compute_dtype).at[:Km1, :D].set(
        w.astype(compute_dtype))
    b_p = jnp.zeros((1, Kpad), jnp.float32).at[0, :Km1].set(bias)

    kernel = _make_kernel(compute_dtype, TD, D, mask_last, single_k)

    out = pl.pallas_call(
        kernel,
        out_shape=jax.ShapeDtypeStruct((B, Kpad), jnp.float32),
        grid_spec=pltpu.PrefetchScalarGridSpec(
            num_scalar_prefetch=0,
            grid=(num_bt, num_k),
            in_specs=[
                pl.BlockSpec((TB, TD), lambda i, k: (i, k)),       # x tile (native dtype)
                pl.BlockSpec((Kpad, D_pad), lambda i, k: (0, 0)),  # resident weights
                pl.BlockSpec((1, Kpad), lambda i, k: (0, 0)),      # resident bias
            ],
            out_specs=pl.BlockSpec((TB, Kpad), lambda i, k: (i, 0)),
        ),
        compiler_params=pltpu.CompilerParams(
            dimension_semantics=("parallel", "arbitrary"),
            vmem_limit_bytes=int(vmem * 0.75),
        ),
    )(x, w_p, b_p)

    return out[:, :Km1]


def clust_dist_reference(x, centroids, clust_list, curr_clust_id):
    """Pure-JAX reference mirroring the PyTorch loop exactly."""
    curr_pos = clust_list.index(curr_clust_id)
    outs = []
    for i in clust_list:
        if i == curr_clust_id:
            continue
        j = clust_list.index(i)
        w = 2.0 * (centroids[curr_pos] - centroids[j])
        b = jnp.linalg.norm(centroids[curr_pos]) - jnp.linalg.norm(centroids[j])
        outs.append((x @ w + b)[:, None])
    return jnp.concatenate(outs, axis=1)


if __name__ == "__main__":
    # Small deterministic setup: batch=8, hidden=32, n_clusters=4.
    B, D, K = 8, 32, 4
    clust_list = [0, 1, 2, 3]
    curr_clust_id = 1

    key = jax.random.PRNGKey(0)
    kx, kc = jax.random.split(key)
    x = jax.random.normal(kx, (B, D), dtype=jnp.float32)
    centroids = jax.random.normal(kc, (K, D), dtype=jnp.float32)

    ref = clust_dist_reference(x, centroids, clust_list, curr_clust_id)

    # 1) Exact check: f32-compute Pallas path (whole-D, single k) vs reference.
    out_f32 = jax.block_until_ready(clust_dist_forward(
        x, centroids, clust_list, curr_clust_id,
        compute_dtype=jnp.float32, use_pallas=True))
    assert out_f32.shape == (B, K - 1), out_f32.shape
    assert jnp.allclose(out_f32, ref, atol=1e-3, rtol=1e-3), "f32 mismatch"

    # 2) Default bf16-MXU path (x cast in-kernel) vs bf16-quantized reference.
    #    NOTE: default compute_dtype=bf16 deliberately trades a little precision
    #    for halved MXU-input width; pass compute_dtype=jnp.float32 for parity.
    out_bf16 = jax.block_until_ready(clust_dist_forward(
        x, centroids, clust_list, curr_clust_id, use_pallas=True))
    curr_pos = clust_list.index(curr_clust_id)
    other = jnp.asarray(
        [p for p, c in enumerate(clust_list) if c != curr_clust_id], jnp.int32)
    xq = x.astype(jnp.bfloat16).astype(jnp.float32)
    wq = (2.0 * (centroids[curr_pos][None, :] - centroids[other])
          ).astype(jnp.bfloat16).astype(jnp.float32)
    bq = (jnp.linalg.norm(centroids[curr_pos])
          - jnp.linalg.norm(centroids[other], axis=1))
    ref_bf16 = xq @ wq.T + bq[None, :]
    assert out_bf16.shape == (B, K - 1), out_bf16.shape
    assert jnp.allclose(out_bf16, ref_bf16, atol=2e-2, rtol=2e-2), "bf16 mismatch"

    # 3) D-tiled path (resident weights sliced in-kernel, masked ragged last
    #    lane tile, direct accumulation into the f32 output), ragged B too.
    B2, D2 = 13, 320
    x2 = jax.random.normal(jax.random.PRNGKey(2), (B2, D2), dtype=jnp.float32)
    c2 = jax.random.normal(jax.random.PRNGKey(3), (K, D2), dtype=jnp.float32)
    out_t = jax.block_until_ready(clust_dist_forward(
        x2, c2, clust_list, curr_clust_id,
        compute_dtype=jnp.float32, use_pallas=True, max_block_d=128))
    ref_t = clust_dist_reference(x2, c2, clust_list, curr_clust_id)
    assert out_t.shape == (B2, K - 1), out_t.shape
    assert jnp.allclose(out_t, ref_t, atol=1e-3, rtol=1e-3), "tiled-D mismatch"

    print("KERNEL_OK")
</pallas_src>

<mosaic_0001>
module attributes {stable_mosaic.version = 11 : i64} {
  func.func @kernel(%arg0: i32, %arg1: i32, %arg2: memref<8x32xf32, #tpu.memory_space<vmem>>, %arg3: memref<128x32xf32, #tpu.memory_space<vmem>>, %arg4: memref<1x128xf32, #tpu.memory_space<vmem>>, %arg5: memref<8x128xf32, #tpu.memory_space<vmem>>) attributes {dimension_semantics = [#tpu.dimension_semantics<parallel>, #tpu.dimension_semantics<arbitrary>], iteration_bounds = array<i64: 1, 1>, scalar_prefetch = 0 : i64, scratch_operands = 0 : i64, tpu.core_type = #tpu.core_type<tc>, window_params = [{transform_indices = @transform_0, window_bounds = array<i64: 8, 32>}, {pipeline_mode = #tpu.pipeline_mode<synchronous>, transform_indices = @transform_1, window_bounds = array<i64: 128, 32>}, {pipeline_mode = #tpu.pipeline_mode<synchronous>, transform_indices = @transform_2, window_bounds = array<i64: 1, 128>}, {transform_indices = @transform_3, window_bounds = array<i64: 8, 128>}]} {
    %c0 = arith.constant 0 : index
    %c0_0 = arith.constant 0 : index
    %0 = vector.load %arg2[%c0, %c0_0] : memref<8x32xf32, #tpu.memory_space<vmem>>, vector<8x32xf32>
    %c0_1 = arith.constant 0 : index
    %c0_2 = arith.constant 0 : index
    %1 = vector.load %arg3[%c0_1, %c0_2] : memref<128x32xf32, #tpu.memory_space<vmem>>, vector<128x32xf32>
    %cst = arith.constant dense<0.000000e+00> : vector<8x128xf32>
    %2 = tpu.matmul %0, %1, %cst {dimension_numbers = #tpu.dot_dimension_numbers<[1], [1], [0], [0], [0, 0, 1, 0], [], []>} : vector<8x32xf32>, vector<128x32xf32>, vector<8x128xf32> -> vector<8x128xf32>
    %c0_3 = arith.constant 0 : index
    %c0_4 = arith.constant 0 : index
    %3 = vector.load %arg4[%c0_3, %c0_4] : memref<1x128xf32, #tpu.memory_space<vmem>>, vector<1x128xf32>
    %4 = vector.broadcast %3 : vector<1x128xf32> to vector<8x128xf32>
    %5 = arith.addf %2, %4 : vector<8x128xf32>
    %c0_5 = arith.constant 0 : index
    %c0_6 = arith.constant 0 : index
    %6 = vector.load %arg5[%c0_5, %c0_6] : memref<8x128xf32, #tpu.memory_space<vmem>>, vector<8x128xf32>
    tpu.vector_store %arg5[%c0_5, %c0_6], %5 {strides = array<i32>} : memref<8x128xf32, #tpu.memory_space<vmem>>, vector<8x128xf32>,
    return
  }
  func.func @transform_0(%arg0: i32, %arg1: i32) -> (i32, i32) {
    %c0_i32 = arith.constant 0 : i32
    return %arg0, %arg1 : i32, i32
  }
  func.func @transform_1(%arg0: i32, %arg1: i32) -> (i32, i32) {
    %c0_i32 = arith.constant 0 : i32
    %c0_i32_0 = arith.constant 0 : i32
    %c0_i32_1 = arith.constant 0 : i32
    return %c0_i32, %c0_i32_0 : i32, i32
  }
  func.func @transform_2(%arg0: i32, %arg1: i32) -> (i32, i32) {
    %c0_i32 = arith.constant 0 : i32
    %c0_i32_0 = arith.constant 0 : i32
    %c0_i32_1 = arith.constant 0 : i32
    return %c0_i32, %c0_i32_0 : i32, i32
  }
  func.func @transform_3(%arg0: i32, %arg1: i32) -> (i32, i32) {
    %c0_i32 = arith.constant 0 : i32
    %c0_i32_0 = arith.constant 0 : i32
    return %arg0, %c0_i32 : i32, i32
  }
}

</mosaic_0001>

<llo_original>
// kernel: tpu_custom_call.1
$region0: #{tpu_custom_call.1}
  #allocation0 [shape = 'u32[]', space=smem, size = 0x4, offset = 0x4, fixed_abs, tag = 'smem constant byte address 0x4 - core index']
  #allocation1 [shape = 'u32[144,128]{1,0:T(1,128)}', space=vmem, size = 0x12000, scoped, tag = 'internal scratch']
  %s0 = inlined_call_operand.vmem [shape: f32[8,32], index: 0, kind: input, shape index: {}]
  %s1 = inlined_call_operand.vmem [shape: f32[128,32], index: 1, kind: input, shape index: {}]
  %s2 = inlined_call_operand.vmem [shape: f32[1,128], index: 2, kind: input, shape index: {}]
  %s3 = inlined_call_operand.hbm [shape: f32[8,128], index: 3, kind: output, shape index: {}]
  %s4 = sld [smem:[#allocation0]]
  $region22: #{tpu_custom_call.1} parent=0
    _
  %s6 = ssub.s32 1, %s4
  %s7 = scalar_select 0, %s6, %s4
  $region1: #{tpu_custom_call.1} parent=0
    #allocation2 [shape = 'u8[4096]{0}', space=vmem, size = 0x1000, scoped, tag = 'output window, operand 0, single buffered']
    #allocation3 [shape = 's32[1]{0}', space=sflag, size = 0x4, scoped, tag = 'scoped memory for tpu_custom_call.1']
    %8 = vsyncpa [#allocation3], 0
    // Predicated region
    $region2: #{tpu_custom_call.1} parent=1 // pred_check
      _
    $region3: #{tpu_custom_call.1} parent=1 // pred_check_branch
      %10 = sbr.rel (0) target = $region5
    $region4: #{tpu_custom_call.1} parent=1 // pred_region
      _
    $region5: #{tpu_custom_call.1} parent=1 // pred_fallthru
      _
    // Predicated region
    $region6: #{tpu_custom_call.1} parent=1 // pred_check
      _
    $region7: #{tpu_custom_call.1} parent=1 // pred_check_branch
      %12 = sbr.rel (0) target = $region9
    $region8: #{tpu_custom_call.1} parent=1 // pred_region
      _
    $region9: #{tpu_custom_call.1} parent=1 // pred_fallthru
      _
    // Predicated region
    $region10: #{tpu_custom_call.1} parent=1 // pred_check
      _
    $region11: #{tpu_custom_call.1} parent=1 // pred_check_branch
      %14 = sbr.rel (0) target = $region13
    $region12: #{tpu_custom_call.1} parent=1 // pred_region
      _
    $region13: #{tpu_custom_call.1} parent=1 // pred_fallthru
      _
    %v15 = vld [vmem:[%s0] sm:$0xff]
    %v16 = vld [vmem:[%s1] sm:$0xff]
    %v17 = vld [vmem:[%s1 + $0x8] sm:$0xff]
    %v18 = vld [vmem:[%s1 + $0x10] sm:$0xff]
    %v19 = vld [vmem:[%s1 + $0x18] sm:$0xff]
    %v20 = vld [vmem:[%s1 + $0x20] sm:$0xff]
    %v21 = vld [vmem:[%s1 + $0x28] sm:$0xff]
    %v22 = vld [vmem:[%s1 + $0x30] sm:$0xff]
    %v23 = vld [vmem:[%s1 + $0x38] sm:$0xff]
    %v24 = vld [vmem:[%s1 + $0x40] sm:$0xff]
    %v25 = vld [vmem:[%s1 + $0x48] sm:$0xff]
    %v26 = vld [vmem:[%s1 + $0x50] sm:$0xff]
    %v27 = vld [vmem:[%s1 + $0x58] sm:$0xff]
    %v28 = vld [vmem:[%s1 + $0x60] sm:$0xff]
    %v29 = vld [vmem:[%s1 + $0x68] sm:$0xff]
    %v30 = vld [vmem:[%s1 + $0x70] sm:$0xff]
    %v31 = vld [vmem:[%s1 + $0x78] sm:$0xff]
    %v32 = vld [vmem:[%s2] sm:$0x1]
    %v34 = vlaneseq
    %v35 = vshrl.u32 %v34, 7
    %v36 = vsub.s32 0, %v35
    %v37 = vrot.slane %v32, %v36
    %vm39 = vcmask 261120
    %v41 = vsel %vm39, %v15, 0
    %v44 = vsel %vm39, %v16, 0
    %v47 = vsel %vm39, %v17, 0
    %v50 = vsel %vm39, %v18, 0
    %v53 = vsel %vm39, %v19, 0
    %v56 = vsel %vm39, %v20, 0
    %v59 = vsel %vm39, %v21, 0
    %v62 = vsel %vm39, %v22, 0
    %v65 = vsel %vm39, %v23, 0
    %v68 = vsel %vm39, %v24, 0
    %v71 = vsel %vm39, %v25, 0
    %v74 = vsel %vm39, %v26, 0
    %v77 = vsel %vm39, %v27, 0
    %v80 = vsel %vm39, %v28, 0
    %v83 = vsel %vm39, %v29, 0
    %v86 = vsel %vm39, %v30, 0
    %v89 = vsel %vm39, %v31, 0
    %91 = vmatprep.subr.mxu0 0.0
    %92 = vmatpush1.xpose.msra.mxu0 %v44
    %93 = vmatprep.subr.mxu0 0.0
    %94 = vmatpush1.xpose.msra.mxu0 %v47
    %95 = vmatprep.subr.mxu0 0.0
    %96 = vmatpush1.xpose.msra.mxu0 %v50
    %97 = vmatprep.subr.mxu0 0.0
    %98 = vmatpush1.xpose.msra.mxu0 %v53
    %99 = vmatprep.subr.mxu0 0.0
    %100 = vmatpush1.xpose.msra.mxu0 %v56
    %101 = vmatprep.subr.mxu0 0.0
    %102 = vmatpush1.xpose.msra.mxu0 %v59
    %103 = vmatprep.subr.mxu0 0.0
    %104 = vmatpush1.xpose.msra.mxu0 %v62
    %105 = vmatprep.subr.mxu0 0.0
    %106 = vmatpush1.xpose.msra.mxu0 %v65
    %107 = vmatprep.subr.mxu0 0.0
    %108 = vmatpush1.xpose.msra.mxu0 %v68
    %109 = vmatprep.subr.mxu0 0.0
    %110 = vmatpush1.xpose.msra.mxu0 %v71
    %111 = vmatprep.subr.mxu0 0.0
    %112 = vmatpush1.xpose.msra.mxu0 %v74
    %113 = vmatprep.subr.mxu0 0.0
    %114 = vmatpush1.xpose.msra.mxu0 %v77
    %115 = vmatprep.subr.mxu0 0.0
    %116 = vmatpush1.xpose.msra.mxu0 %v80
    %117 = vmatprep.subr.mxu0 0.0
    %118 = vmatpush1.xpose.msra.mxu0 %v83
    %119 = vmatprep.subr.mxu0 0.0
    %120 = vmatpush1.xpose.msra.mxu0 %v86
    %121 = vmatprep.subr.mxu0 0.0
    %122 = vmatpush1.xpose.msra.mxu0 %v89
    %123 = vmatprep.subr.mxu0 0.0
    %124 = vmatpush1.xpose.msra.mxu0 0.0
    %125 = vmatprep.subr.mxu0 0.0
    %126 = vmatpush1.xpose.msra.mxu0 0.0
    %127 = vmatprep.subr.mxu0 0.0
    %128 = vmatpush1.xpose.msra.mxu0 0.0
    %129 = vmatprep.subr.mxu0 0.0
    %130 = vmatpush1.xpose.msra.mxu0 0.0
    %131 = vmatprep.subr.mxu0 0.0
    %132 = vmatpush1.xpose.msra.mxu0 0.0
    %133 = vmatprep.subr.mxu0 0.0
    %134 = vmatpush1.xpose.msra.mxu0 0.0
    %135 = vmatprep.subr.mxu0 0.0
    %136 = vmatpush1.xpose.msra.mxu0 0.0
    %137 = vmatprep.subr.mxu0 0.0
    %138 = vmatpush1.xpose.msra.mxu0 0.0
    %139 = vmatprep.subr.mxu0 0.0
    %140 = vmatpush1.xpose.msra.mxu0 0.0
    %141 = vmatprep.subr.mxu0 0.0
    %142 = vmatpush1.xpose.msra.mxu0 0.0
    %143 = vmatprep.subr.mxu0 0.0
    %144 = vmatpush1.xpose.msra.mxu0 0.0
    %145 = vmatprep.subr.mxu0 0.0
    %146 = vmatpush1.xpose.msra.mxu0 0.0
    %147 = vmatprep.subr.mxu0 0.0
    %148 = vmatpush1.xpose.msra.mxu0 0.0
    %149 = vmatprep.subr.mxu0 0.0
    %150 = vmatpush1.xpose.msra.mxu0 0.0
    %151 = vmatprep.subr.mxu0 0.0
    %152 = vmatpush1.xpose.msra.mxu0 0.0
    %153 = vmatprep.subr.mxu0 0.0
    %154 = vmatpush1.xpose.msra.mxu0 0.0
    %155 = vmatprep.mubr.f32.mxu0 0.0
    %156 = vmatmul.mubr.f32.gmra.mrb[0].mxu0 %v41
    %v157 = vpop.f32.mrb[0].mxu0
    %v158 = vadd.f32 %v37, %v157
    %v159 = vpop.f32.mrb[0].mxu0
    %160 = vdwg.mxu0
    %161 = vst [vmem:[#allocation2] sm:$0xff] %v158
    // Predicated region
    $region14: #{tpu_custom_call.1} parent=1 // pred_check
      _
    $region15: #{tpu_custom_call.1} parent=1 // pred_check_branch
      %163 = sbr.rel (0) target = $region17
    $region16: #{tpu_custom_call.1} parent=1 // pred_region
      %s165 = ssub.s32 128, 128
      %166 = vsyncadd [#allocation3], %s165
      %s168 = sshll.u32 [#allocation2], 4
      %s169 = int_to_ptr.vmem [resolvable:$true] %s168
      %171 = dma.vmem_to_hbm [thread:$0]  %s169, 128, %s3, [#allocation3]
    $region17: #{tpu_custom_call.1} parent=1 // pred_fallthru
      _
    // Predicated region
    $region18: #{tpu_custom_call.1} parent=1 // pred_check
      _
    $region19: #{tpu_custom_call.1} parent=1 // pred_check_branch
      %173 = sbr.rel (0) target = $region21
    $region20: #{tpu_custom_call.1} parent=1 // pred_region
      %174 = dma.done [#allocation3], 128
    $region21: #{tpu_custom_call.1} parent=1 // pred_fallthru
      _
    %175 = vsyncpa [#allocation3], 1

</llo_original>
